<compile_context>
chip_gen: v6e
topology: v6e:2x2x1
jax: 0.10.0
libtpu: 0.0.40
codegen_flags: <defaults>
</compile_context>

<pallas_src>
import functools

import numpy as np
import jax
import jax.numpy as jnp
from jax.experimental import pallas as pl
from jax.experimental.pallas import tpu as pltpu

_LANE = 128


# ---------------------------------------------------------------------------
# Deterministic "parameters" (same math as AntiAliasInterpolation2d.__init__).
# ---------------------------------------------------------------------------
def _aa_params(scale):
    """Returns (kernel_size, ka, int stride, normalized 1-D gaussian float64)."""
    sigma = (1.0 / scale - 1.0) / 2.0
    ksize = 2 * int(round(sigma * 4)) + 1          # always odd -> ka == kb
    ka = ksize // 2
    stride = int(1.0 / scale)
    mean = (ksize - 1) / 2.0
    g = np.exp(-((np.arange(ksize, dtype=np.float64) - mean) ** 2)
               / (2.0 * sigma ** 2))
    gn = g / g.sum()                               # outer(gn, gn) == normalized 2-D kernel
    return ksize, ka, stride, gn


def _downsample_matrices(scale, H, W):
    """Banded operators A (Ho,H), B (W,Wo) with zero-pad, 1-D blur and ::stride folded in."""
    ksize, ka, stride, gn = _aa_params(scale)
    Ho = -(-H // stride)                           # == len(range(0, H, stride))
    Wo = -(-W // stride)
    A = np.zeros((Ho, H), dtype=np.float64)
    for yo in range(Ho):
        for i in range(ksize):
            y = yo * stride + i - ka
            if 0 <= y < H:                         # out-of-range taps hit zero padding
                A[yo, y] = gn[i]
    B = np.zeros((W, Wo), dtype=np.float64)
    for xo in range(Wo):
        for j in range(ksize):
            w = xo * stride + j - ka
            if 0 <= w < W:
                B[w, xo] = gn[j]
    return A.astype(np.float32), B.astype(np.float32), Ho, Wo


# ---------------------------------------------------------------------------
# Fused kernel: one (n, channel-block) slab in, every non-unit pyramid level out.
# refs = [A_0, A_1, ..., out_0, out_1, ...]
# ---------------------------------------------------------------------------
def _pyramid_kernel(x_ref, bcat_ref, *refs, scale_meta, cb, hh, ww):
    ns = len(scale_meta)
    a_refs = refs[:ns]
    out_refs = refs[ns:]

    xblk = x_ref[0]                                         # (Cb, H, W) native dtype
    if xblk.dtype != bcat_ref.dtype:                        # bf16 stays bf16; f32 stays f32
        xblk = xblk.astype(bcat_ref.dtype)
    bcat = bcat_ref[...]                                    # (W, Wp_total)

    # Horizontal blur + W-subsample for ALL scales in one fat MXU matmul.
    if (hh % 8 == 0) or cb == 1:
        t2d = jnp.dot(xblk.reshape(cb * hh, ww), bcat,
                      preferred_element_type=jnp.float32)   # (Cb*H, Wp_total) f32
        tsl = [t2d[c * hh:(c + 1) * hh] for c in range(cb)]
    else:
        # Sublane-unfriendly H: keep per-channel B-pass (still one weight push
        # per channel thanks to the concatenated B).
        tsl = [jnp.dot(xblk[c], bcat, preferred_element_type=jnp.float32)
               for c in range(cb)]

    # Vertical blur + H-subsample: per scale, short unrolled per-channel loop.
    for s, (off, wo, _ho) in enumerate(scale_meta):
        a = a_refs[s][...]                                  # (Ho, H) f32, tiny
        oref = out_refs[s]
        for c in range(cb):
            o = jnp.dot(a, tsl[c][:, off:off + wo],
                        preferred_element_type=jnp.float32)  # (Ho, Wo)
            oref[0, c] = o.astype(oref.dtype)


# ---------------------------------------------------------------------------
# Wrapper: VMEM sizing, channel-block choice, operator assembly, pallas_call.
# ---------------------------------------------------------------------------
def _vmem_limit_bytes():
    cap = 0
    try:
        cap = int(pltpu.get_tpu_info().vmem_capacity_bytes)
    except Exception:
        cap = 0
    if cap <= 0:
        cap = 64 * 1024 * 1024                   # conservative: v7x per-core VMEM
    # Leave headroom: ~48 MiB on v7x (64 MiB phys), ~96-100 MiB on v5e/v6e (128 MiB).
    return min((cap * 3) // 4, 100 * 1024 * 1024)


def _choose_channel_block(N, C, H, W, in_item, out_item, dims, wp_total, budget):
    """Largest channel block whose per-step working set fits the VMEM budget."""
    ab_bytes = W * wp_total * 4 + sum(ho * H * 4 for (ho, _wo) in dims)
    feasible = []
    for cb in range(1, min(C, 16) + 1):
        if C % cb:
            continue
        need = 2 * cb * H * W * in_item                      # double-buffered input block
        need += cb * H * W * 4                               # in-kernel cast/reshape copy
        need += cb * H * wp_total * 4                        # f32 B-pass intermediate
        need += sum(2 * cb * ho * wo * out_item for (ho, wo) in dims)
        need += 2 * ab_bytes
        if need <= budget:
            feasible.append(cb)
    if not feasible:
        return 1
    # Prefer keeping >=2 grid steps (DMA/compute overlap + megacore balance).
    multi = [cb for cb in feasible if N * (C // cb) >= 2]
    return max(multi) if multi else max(feasible)


def image_pyramide(x, scales):
    """Pallas implementation of ImagePyramide.forward (NCHW input)."""
    N, C, H, W = x.shape
    out_dict = {}
    pending = []
    seen = set()
    for scale in scales:
        key = 'prediction_' + str(scale).replace('.', '-').replace('-', '.')
        if float(scale) == 1.0:
            out_dict[key] = x                                 # identity level
        elif key not in seen:
            seen.add(key)
            pending.append((key, scale))
    if not pending:
        return out_dict

    # bf16 inputs ride the native full-rate MXU path; everything else runs f32.
    op_dtype = jnp.bfloat16 if x.dtype == jnp.bfloat16 else jnp.float32

    # Assemble per-scale A operators and one concatenated, 128-lane-aligned B.
    a_mats, b_cols, metas, dims, keys = [], [], [], [], []
    off = 0
    for key, scale in pending:
        A, B, Ho, Wo = _downsample_matrices(scale, H, W)
        wo_pad = -(-Wo // _LANE) * _LANE
        Bp = np.zeros((W, wo_pad), dtype=np.float32)
        Bp[:, :Wo] = B
        a_mats.append(A)
        b_cols.append(Bp)
        metas.append((off, Wo, Ho))
        dims.append((Ho, Wo))
        keys.append(key)
        off += wo_pad
    wp_total = off
    b_concat = np.concatenate(b_cols, axis=1)                 # (W, wp_total)

    vmem_limit = _vmem_limit_bytes()
    in_item = jnp.dtype(x.dtype).itemsize
    cb = _choose_channel_block(N, C, H, W, in_item, in_item, dims, wp_total,
                               budget=int(vmem_limit * 0.85))
    # TODO(synk): 4K-class frames where even a single (1,1,H,W) plane exceeds the
    # VMEM budget would additionally need an "arbitrary" H-accumulation grid axis.

    in_specs = [
        pl.BlockSpec((1, cb, H, W), lambda n, c: (n, c, 0, 0)),
        pl.BlockSpec((W, wp_total), lambda n, c: (0, 0)),
    ]
    call_args = [x, jnp.asarray(b_concat, dtype=op_dtype)]
    for A in a_mats:
        in_specs.append(pl.BlockSpec(A.shape, lambda n, c: (0, 0)))
        call_args.append(jnp.asarray(A, dtype=jnp.float32))

    out_shapes, out_specs = [], []
    for (Ho, Wo) in dims:
        out_shapes.append(jax.ShapeDtypeStruct((N, C, Ho, Wo), x.dtype))
        out_specs.append(pl.BlockSpec((1, cb, Ho, Wo), lambda n, c: (n, c, 0, 0)))

    outs = pl.pallas_call(
        functools.partial(_pyramid_kernel, scale_meta=tuple(metas),
                          cb=cb, hh=H, ww=W),
        out_shape=tuple(out_shapes),
        grid=(N, C // cb),
        in_specs=in_specs,
        out_specs=tuple(out_specs),
        compiler_params=pltpu.CompilerParams(
            dimension_semantics=("parallel", "parallel"),
            vmem_limit_bytes=vmem_limit),
    )(*call_args)

    for key, o in zip(keys, outs):
        out_dict[key] = o
    return out_dict


# ---------------------------------------------------------------------------
# Float64 NumPy reference (pad -> depthwise KxK Gaussian -> ::stride).
# ---------------------------------------------------------------------------
def _reference_downsample(x_np, scale):
    x64 = np.asarray(x_np, dtype=np.float64)
    if float(scale) == 1.0:
        return x64
    ksize, ka, stride, gn = _aa_params(scale)
    kern = np.outer(gn, gn)
    N, C, H, W = x64.shape
    xp = np.pad(x64, ((0, 0), (0, 0), (ka, ka), (ka, ka)))
    full = np.zeros((N, C, H, W), dtype=np.float64)
    for i in range(ksize):
        for j in range(ksize):
            full += kern[i, j] * xp[:, :, i:i + H, j:j + W]
    return full[:, :, ::stride, ::stride]


if __name__ == "__main__":
    key = jax.random.PRNGKey(0)
    N, C, H, W = 2, 4, 16, 16
    x = jax.random.normal(key, (N, C, H, W), dtype=jnp.float32)
    scales = [1, 0.5, 0.25]

    # f32 path
    out = image_pyramide(x, scales)
    out = jax.tree_util.tree_map(jax.block_until_ready, out)
    x_np = np.asarray(x)
    for scale in scales:
        k = 'prediction_' + str(scale).replace('.', '-').replace('-', '.')
        got = np.asarray(out[k], dtype=np.float64)
        ref = _reference_downsample(x_np, scale)
        assert got.shape == ref.shape, (k, got.shape, ref.shape)
        err = float(np.max(np.abs(got - ref)))
        # f32 kernel vs f64 reference; bound covers reduced-precision MXU passes.
        assert err < 2e-2, (k, err)

    # bf16 path (native-dtype MXU operands, bf16 B taps) — looser tolerance.
    xb = x.astype(jnp.bfloat16)
    outb = image_pyramide(xb, scales)
    outb = jax.tree_util.tree_map(jax.block_until_ready, outb)
    xb_np = np.asarray(xb, dtype=np.float64)
    for scale in scales:
        k = 'prediction_' + str(scale).replace('.', '-').replace('-', '.')
        got = np.asarray(outb[k], dtype=np.float64)
        ref = _reference_downsample(xb_np, scale)
        assert got.shape == ref.shape, (k, got.shape, ref.shape)
        errb = float(np.max(np.abs(got - ref)))
        assert errb < 1e-1, (k, errb)

    print("KERNEL_OK")
</pallas_src>

<mosaic_0001>
module attributes {stable_mosaic.version = 11 : i64} {
  func.func @_pyramid_kernel(%arg0: i32, %arg1: i32, %arg2: memref<1x4x16x16xf32, #tpu.memory_space<vmem>>, %arg3: memref<16x256xf32, #tpu.memory_space<vmem>>, %arg4: memref<8x16xf32, #tpu.memory_space<vmem>>, %arg5: memref<4x16xf32, #tpu.memory_space<vmem>>, %arg6: memref<1x4x8x8xf32, #tpu.memory_space<vmem>>, %arg7: memref<1x4x4x4xf32, #tpu.memory_space<vmem>>) attributes {dimension_semantics = [#tpu.dimension_semantics<parallel>, #tpu.dimension_semantics<parallel>], iteration_bounds = array<i64: 2, 1>, scalar_prefetch = 0 : i64, scratch_operands = 0 : i64, tpu.core_type = #tpu.core_type<tc>, window_params = [{transform_indices = @transform_0, window_bounds = array<i64: 1, 4, 16, 16>}, {pipeline_mode = #tpu.pipeline_mode<synchronous>, transform_indices = @transform_1, window_bounds = array<i64: 16, 256>}, {pipeline_mode = #tpu.pipeline_mode<synchronous>, transform_indices = @transform_2, window_bounds = array<i64: 8, 16>}, {pipeline_mode = #tpu.pipeline_mode<synchronous>, transform_indices = @transform_3, window_bounds = array<i64: 4, 16>}, {transform_indices = @transform_4, window_bounds = array<i64: 1, 4, 8, 8>}, {transform_indices = @transform_5, window_bounds = array<i64: 1, 4, 4, 4>}]} {
    %c0 = arith.constant 0 : index
    %c0_0 = arith.constant 0 : index
    %c0_1 = arith.constant 0 : index
    %c0_2 = arith.constant 0 : index
    %0 = vector.load %arg2[%c0, %c0_0, %c0_1, %c0_2] : memref<1x4x16x16xf32, #tpu.memory_space<vmem>>, vector<1x4x16x16xf32>
    %1 = vector.shape_cast %0 : vector<1x4x16x16xf32> to vector<4x16x16xf32>
    %c0_3 = arith.constant 0 : index
    %c0_4 = arith.constant 0 : index
    %2 = vector.load %arg3[%c0_3, %c0_4] : memref<16x256xf32, #tpu.memory_space<vmem>>, vector<16x256xf32>
    %3 = vector.shape_cast %1 : vector<4x16x16xf32> to vector<64x16xf32>
    %cst = arith.constant dense<0.000000e+00> : vector<64x256xf32>
    %4 = tpu.matmul %3, %2, %cst {dimension_numbers = #tpu.dot_dimension_numbers<[1], [0], [0], [1], [0, 0, 1, 1], [], []>} : vector<64x16xf32>, vector<16x256xf32>, vector<64x256xf32> -> vector<64x256xf32>
    %5 = vector.extract_strided_slice %4 {offsets = [0, 0], sizes = [16, 256], strides = [1, 1]} : vector<64x256xf32> to vector<16x256xf32>
    %6 = vector.extract_strided_slice %4 {offsets = [16, 0], sizes = [16, 256], strides = [1, 1]} : vector<64x256xf32> to vector<16x256xf32>
    %7 = vector.extract_strided_slice %4 {offsets = [32, 0], sizes = [16, 256], strides = [1, 1]} : vector<64x256xf32> to vector<16x256xf32>
    %8 = vector.extract_strided_slice %4 {offsets = [48, 0], sizes = [16, 256], strides = [1, 1]} : vector<64x256xf32> to vector<16x256xf32>
    %c0_5 = arith.constant 0 : index
    %c0_6 = arith.constant 0 : index
    %9 = vector.load %arg4[%c0_5, %c0_6] : memref<8x16xf32, #tpu.memory_space<vmem>>, vector<8x16xf32>
    %10 = vector.extract_strided_slice %5 {offsets = [0, 0], sizes = [16, 8], strides = [1, 1]} : vector<16x256xf32> to vector<16x8xf32>
    %cst_7 = arith.constant dense<0.000000e+00> : vector<8x8xf32>
    %11 = tpu.matmul %9, %10, %cst_7 {dimension_numbers = #tpu.dot_dimension_numbers<[1], [0], [0], [1], [0, 0, 1, 1], [], []>} : vector<8x16xf32>, vector<16x8xf32>, vector<8x8xf32> -> vector<8x8xf32>
    %c0_8 = arith.constant 0 : index
    %c0_9 = arith.constant 0 : index
    %c0_10 = arith.constant 0 : index
    %c0_11 = arith.constant 0 : index
    %12 = vector.load %arg6[%c0_8, %c0_9, %c0_10, %c0_11] : memref<1x4x8x8xf32, #tpu.memory_space<vmem>>, vector<1x1x8x8xf32>
    %13 = vector.shape_cast %12 : vector<1x1x8x8xf32> to vector<8x8xf32>
    %14 = vector.shape_cast %11 : vector<8x8xf32> to vector<1x1x8x8xf32>
    tpu.vector_store %arg6[%c0_8, %c0_9, %c0_10, %c0_11], %14 {strides = array<i32>} : memref<1x4x8x8xf32, #tpu.memory_space<vmem>>, vector<1x1x8x8xf32>,
    %15 = vector.extract_strided_slice %6 {offsets = [0, 0], sizes = [16, 8], strides = [1, 1]} : vector<16x256xf32> to vector<16x8xf32>
    %cst_12 = arith.constant dense<0.000000e+00> : vector<8x8xf32>
    %16 = tpu.matmul %9, %15, %cst_12 {dimension_numbers = #tpu.dot_dimension_numbers<[1], [0], [0], [1], [0, 0, 1, 1], [], []>} : vector<8x16xf32>, vector<16x8xf32>, vector<8x8xf32> -> vector<8x8xf32>
    %c0_13 = arith.constant 0 : index
    %c1 = arith.constant 1 : index
    %c0_14 = arith.constant 0 : index
    %c0_15 = arith.constant 0 : index
    %17 = vector.load %arg6[%c0_13, %c1, %c0_14, %c0_15] : memref<1x4x8x8xf32, #tpu.memory_space<vmem>>, vector<1x1x8x8xf32>
    %18 = vector.shape_cast %17 : vector<1x1x8x8xf32> to vector<8x8xf32>
    %19 = vector.shape_cast %16 : vector<8x8xf32> to vector<1x1x8x8xf32>
    tpu.vector_store %arg6[%c0_13, %c1, %c0_14, %c0_15], %19 {strides = array<i32>} : memref<1x4x8x8xf32, #tpu.memory_space<vmem>>, vector<1x1x8x8xf32>,
    %20 = vector.extract_strided_slice %7 {offsets = [0, 0], sizes = [16, 8], strides = [1, 1]} : vector<16x256xf32> to vector<16x8xf32>
    %cst_16 = arith.constant dense<0.000000e+00> : vector<8x8xf32>
    %21 = tpu.matmul %9, %20, %cst_16 {dimension_numbers = #tpu.dot_dimension_numbers<[1], [0], [0], [1], [0, 0, 1, 1], [], []>} : vector<8x16xf32>, vector<16x8xf32>, vector<8x8xf32> -> vector<8x8xf32>
    %c0_17 = arith.constant 0 : index
    %c2 = arith.constant 2 : index
    %c0_18 = arith.constant 0 : index
    %c0_19 = arith.constant 0 : index
    %22 = vector.load %arg6[%c0_17, %c2, %c0_18, %c0_19] : memref<1x4x8x8xf32, #tpu.memory_space<vmem>>, vector<1x1x8x8xf32>
    %23 = vector.shape_cast %22 : vector<1x1x8x8xf32> to vector<8x8xf32>
    %24 = vector.shape_cast %21 : vector<8x8xf32> to vector<1x1x8x8xf32>
    tpu.vector_store %arg6[%c0_17, %c2, %c0_18, %c0_19], %24 {strides = array<i32>} : memref<1x4x8x8xf32, #tpu.memory_space<vmem>>, vector<1x1x8x8xf32>,
    %25 = vector.extract_strided_slice %8 {offsets = [0, 0], sizes = [16, 8], strides = [1, 1]} : vector<16x256xf32> to vector<16x8xf32>
    %cst_20 = arith.constant dense<0.000000e+00> : vector<8x8xf32>
    %26 = tpu.matmul %9, %25, %cst_20 {dimension_numbers = #tpu.dot_dimension_numbers<[1], [0], [0], [1], [0, 0, 1, 1], [], []>} : vector<8x16xf32>, vector<16x8xf32>, vector<8x8xf32> -> vector<8x8xf32>
    %c0_21 = arith.constant 0 : index
    %c3 = arith.constant 3 : index
    %c0_22 = arith.constant 0 : index
    %c0_23 = arith.constant 0 : index
    %27 = vector.load %arg6[%c0_21, %c3, %c0_22, %c0_23] : memref<1x4x8x8xf32, #tpu.memory_space<vmem>>, vector<1x1x8x8xf32>
    %28 = vector.shape_cast %27 : vector<1x1x8x8xf32> to vector<8x8xf32>
    %29 = vector.shape_cast %26 : vector<8x8xf32> to vector<1x1x8x8xf32>
    tpu.vector_store %arg6[%c0_21, %c3, %c0_22, %c0_23], %29 {strides = array<i32>} : memref<1x4x8x8xf32, #tpu.memory_space<vmem>>, vector<1x1x8x8xf32>,
    %c0_24 = arith.constant 0 : index
    %c0_25 = arith.constant 0 : index
    %30 = vector.load %arg5[%c0_24, %c0_25] : memref<4x16xf32, #tpu.memory_space<vmem>>, vector<4x16xf32>
    %31 = vector.extract_strided_slice %5 {offsets = [0, 128], sizes = [16, 4], strides = [1, 1]} : vector<16x256xf32> to vector<16x4xf32>
    %cst_26 = arith.constant dense<0.000000e+00> : vector<4x4xf32>
    %32 = tpu.matmul %30, %31, %cst_26 {dimension_numbers = #tpu.dot_dimension_numbers<[1], [0], [0], [1], [0, 0, 1, 1], [], []>} : vector<4x16xf32>, vector<16x4xf32>, vector<4x4xf32> -> vector<4x4xf32>
    %c0_27 = arith.constant 0 : index
    %c0_28 = arith.constant 0 : index
    %c0_29 = arith.constant 0 : index
    %c0_30 = arith.constant 0 : index
    %33 = vector.load %arg7[%c0_27, %c0_28, %c0_29, %c0_30] : memref<1x4x4x4xf32, #tpu.memory_space<vmem>>, vector<1x1x4x4xf32>
    %34 = vector.shape_cast %33 : vector<1x1x4x4xf32> to vector<4x4xf32>
    %35 = vector.shape_cast %32 : vector<4x4xf32> to vector<1x1x4x4xf32>
    tpu.vector_store %arg7[%c0_27, %c0_28, %c0_29, %c0_30], %35 {strides = array<i32>} : memref<1x4x4x4xf32, #tpu.memory_space<vmem>>, vector<1x1x4x4xf32>,
    %36 = vector.extract_strided_slice %6 {offsets = [0, 128], sizes = [16, 4], strides = [1, 1]} : vector<16x256xf32> to vector<16x4xf32>
    %cst_31 = arith.constant dense<0.000000e+00> : vector<4x4xf32>
    %37 = tpu.matmul %30, %36, %cst_31 {dimension_numbers = #tpu.dot_dimension_numbers<[1], [0], [0], [1], [0, 0, 1, 1], [], []>} : vector<4x16xf32>, vector<16x4xf32>, vector<4x4xf32> -> vector<4x4xf32>
    %c0_32 = arith.constant 0 : index
    %c1_33 = arith.constant 1 : index
    %c0_34 = arith.constant 0 : index
    %c0_35 = arith.constant 0 : index
    %38 = vector.load %arg7[%c0_32, %c1_33, %c0_34, %c0_35] : memref<1x4x4x4xf32, #tpu.memory_space<vmem>>, vector<1x1x4x4xf32>
    %39 = vector.shape_cast %38 : vector<1x1x4x4xf32> to vector<4x4xf32>
    %40 = vector.shape_cast %37 : vector<4x4xf32> to vector<1x1x4x4xf32>
    tpu.vector_store %arg7[%c0_32, %c1_33, %c0_34, %c0_35], %40 {strides = array<i32>} : memref<1x4x4x4xf32, #tpu.memory_space<vmem>>, vector<1x1x4x4xf32>,
    %41 = vector.extract_strided_slice %7 {offsets = [0, 128], sizes = [16, 4], strides = [1, 1]} : vector<16x256xf32> to vector<16x4xf32>
    %cst_36 = arith.constant dense<0.000000e+00> : vector<4x4xf32>
    %42 = tpu.matmul %30, %41, %cst_36 {dimension_numbers = #tpu.dot_dimension_numbers<[1], [0], [0], [1], [0, 0, 1, 1], [], []>} : vector<4x16xf32>, vector<16x4xf32>, vector<4x4xf32> -> vector<4x4xf32>
    %c0_37 = arith.constant 0 : index
    %c2_38 = arith.constant 2 : index
    %c0_39 = arith.constant 0 : index
    %c0_40 = arith.constant 0 : index
    %43 = vector.load %arg7[%c0_37, %c2_38, %c0_39, %c0_40] : memref<1x4x4x4xf32, #tpu.memory_space<vmem>>, vector<1x1x4x4xf32>
    %44 = vector.shape_cast %43 : vector<1x1x4x4xf32> to vector<4x4xf32>
    %45 = vector.shape_cast %42 : vector<4x4xf32> to vector<1x1x4x4xf32>
    tpu.vector_store %arg7[%c0_37, %c2_38, %c0_39, %c0_40], %45 {strides = array<i32>} : memref<1x4x4x4xf32, #tpu.memory_space<vmem>>, vector<1x1x4x4xf32>,
    %46 = vector.extract_strided_slice %8 {offsets = [0, 128], sizes = [16, 4], strides = [1, 1]} : vector<16x256xf32> to vector<16x4xf32>
    %cst_41 = arith.constant dense<0.000000e+00> : vector<4x4xf32>
    %47 = tpu.matmul %30, %46, %cst_41 {dimension_numbers = #tpu.dot_dimension_numbers<[1], [0], [0], [1], [0, 0, 1, 1], [], []>} : vector<4x16xf32>, vector<16x4xf32>, vector<4x4xf32> -> vector<4x4xf32>
    %c0_42 = arith.constant 0 : index
    %c3_43 = arith.constant 3 : index
    %c0_44 = arith.constant 0 : index
    %c0_45 = arith.constant 0 : index
    %48 = vector.load %arg7[%c0_42, %c3_43, %c0_44, %c0_45] : memref<1x4x4x4xf32, #tpu.memory_space<vmem>>, vector<1x1x4x4xf32>
    %49 = vector.shape_cast %48 : vector<1x1x4x4xf32> to vector<4x4xf32>
    %50 = vector.shape_cast %47 : vector<4x4xf32> to vector<1x1x4x4xf32>
    tpu.vector_store %arg7[%c0_42, %c3_43, %c0_44, %c0_45], %50 {strides = array<i32>} : memref<1x4x4x4xf32, #tpu.memory_space<vmem>>, vector<1x1x4x4xf32>,
    return
  }
  func.func @transform_0(%arg0: i32, %arg1: i32) -> (i32, i32, i32, i32) {
    %c0_i32 = arith.constant 0 : i32
    %c0_i32_0 = arith.constant 0 : i32
    %c0_i32_1 = arith.constant 0 : i32
    return %arg0, %arg1, %c0_i32, %c0_i32_0 : i32, i32, i32, i32
  }
  func.func @transform_1(%arg0: i32, %arg1: i32) -> (i32, i32) {
    %c0_i32 = arith.constant 0 : i32
    %c0_i32_0 = arith.constant 0 : i32
    %c0_i32_1 = arith.constant 0 : i32
    return %c0_i32, %c0_i32_0 : i32, i32
  }
  func.func @transform_2(%arg0: i32, %arg1: i32) -> (i32, i32) {
    %c0_i32 = arith.constant 0 : i32
    %c0_i32_0 = arith.constant 0 : i32
    %c0_i32_1 = arith.constant 0 : i32
    return %c0_i32, %c0_i32_0 : i32, i32
  }
  func.func @transform_3(%arg0: i32, %arg1: i32) -> (i32, i32) {
    %c0_i32 = arith.constant 0 : i32
    %c0_i32_0 = arith.constant 0 : i32
    %c0_i32_1 = arith.constant 0 : i32
    return %c0_i32, %c0_i32_0 : i32, i32
  }
  func.func @transform_4(%arg0: i32, %arg1: i32) -> (i32, i32, i32, i32) {
    %c0_i32 = arith.constant 0 : i32
    %c0_i32_0 = arith.constant 0 : i32
    %c0_i32_1 = arith.constant 0 : i32
    return %arg0, %arg1, %c0_i32, %c0_i32_0 : i32, i32, i32, i32
  }
  func.func @transform_5(%arg0: i32, %arg1: i32) -> (i32, i32, i32, i32) {
    %c0_i32 = arith.constant 0 : i32
    %c0_i32_0 = arith.constant 0 : i32
    %c0_i32_1 = arith.constant 0 : i32
    return %arg0, %arg1, %c0_i32, %c0_i32_0 : i32, i32, i32, i32
  }
}

</mosaic_0001>

<llo_original>
// kernel: tpu_custom_call.1
$region0: #{tpu_custom_call.1}
  #allocation0 [shape = 'u32[]', space=smem, size = 0x4, offset = 0x4, fixed_abs, tag = 'smem constant byte address 0x4 - core index']
  #allocation1 [shape = 'u32[144,128]{1,0:T(1,128)}', space=vmem, size = 0x12000, scoped, tag = 'internal scratch']
  %s0 = inlined_call_operand.hbm [shape: f32[2,4,16,16], index: 0, kind: input, shape index: {}]
  %s1 = inlined_call_operand.hbm [shape: f32[16,256], index: 1, kind: input, shape index: {}]
  %s2 = inlined_call_operand.hbm [shape: f32[8,16], index: 2, kind: input, shape index: {}]
  %s3 = inlined_call_operand.vmem [shape: f32[4,16], index: 3, kind: input, shape index: {}]
  %s4 = inlined_call_operand.hbm [shape: f32[2,4,8,8], index: 4, kind: output, shape index: {0}]
  %s5 = inlined_call_operand.hbm [shape: f32[2,4,4,4], index: 5, kind: output, shape index: {1}]
  %6 = xla_tuple %s4, %s5
  %s7 = sld [smem:[#allocation0]]
  $region69: #{tpu_custom_call.1} parent=0
    _
  %s9 = ssub.s32 1, %s7
  %s10 = scalar_select 0, %s9, %s7
  $region1: #{tpu_custom_call.1} parent=0
    #allocation2 [shape = 'u8[65536]{0}', space=vmem, size = 0x10000, scoped, tag = 'input window, operand 0']
    #allocation3 [shape = 's32[2]{0}', space=sflag, size = 0x8, scoped, tag = 'scoped memory for tpu_custom_call.1']
    #allocation4 [shape = 's32[2]{0}', space=sflag, size = 0x8, scoped, tag = 'scoped memory for tpu_custom_call.1']
    #allocation5 [shape = 'u8[16384]{0}', space=vmem, size = 0x4000, scoped, tag = 'input window, operand 1, single buffered']
    #allocation6 [shape = 's32[1]{0}', space=sflag, size = 0x4, scoped, tag = 'scoped memory for tpu_custom_call.1']
    #allocation7 [shape = 'u8[4096]{0}', space=vmem, size = 0x1000, scoped, tag = 'input window, operand 2, single buffered']
    #allocation8 [shape = 'u8[32768]{0}', space=vmem, size = 0x8000, scoped, tag = 'output window, operand 0']
    #allocation9 [shape = 'u8[16384]{0}', space=vmem, size = 0x4000, scoped, tag = 'output window, operand 1']
    #allocation10 [shape = 's32[2]{0}', space=sflag, size = 0x8, scoped, tag = 'scoped memory for tpu_custom_call.1']
    %11 = vsyncpa [#allocation3], 0
    %s12 = scalar_lea.sflag [#allocation3], 1
    %13 = vsyncpa %s12, 0
    %14 = vsyncpa [#allocation6], 0
    %15 = vsyncpa [#allocation4], 0
    %s16 = scalar_lea.sflag [#allocation4], 1
    %17 = vsyncpa %s16, 0
    %18 = vsyncpa [#allocation10], 0
    %s19 = scalar_lea.sflag [#allocation10], 1
    %20 = vsyncpa %s19, 0
    loop: start=0, step=1, limit=4
    $region2: #{tpu_custom_call.1} parent=1 // loop_pre_header
      _
    $region3: #{tpu_custom_call.1} parent=1 // loop_header
      %s22 = sphi 0, %s26
      %p23 = scmp.ge.s32.totalorder %s22, 4
      %s29 = sphi 0, %s41
      %s30 = sphi 0, %s37
      %s31 = sphi 0, %s29
      %s32 = sphi 0, %s30
      %s33 = sphi 0, %s31
      %s34 = sphi 0, %s32
      %s46 = sphi 0, %s48
      %s49 = sphi 0, %s46
      %s50 = sphi 0, %s49
      %s66 = sphi 0, %s50
      %s70 = sphi 0, %s70
      %s72 = sphi 0, %s70
      %s73 = sphi 0, %s72
      %s87 = sphi 0, %s73
      %s91 = sphi 0, %s91
      %s93 = sphi 0, %s91
      %s94 = sphi 0, %s93
      %s108 = sphi 0, %s94
      %s112 = sphi 0, %s112
      %s114 = sphi 0, %s112
      %s115 = sphi 0, %s114
      %s129 = sphi 0, %s115
      %s137 = sphi 0, %s139
      %s140 = sphi 0, %s137
      %s141 = sphi 0, %s140
      %s157 = sphi 0, %s141
      %s165 = sphi 0, %s167
      %s168 = sphi 0, %s165
      %s169 = sphi 0, %s168
      %s185 = sphi 0, %s169
    $region4: #{tpu_custom_call.1} parent=1 // loop_header_branch
      %25 = sbr.rel (%p23) target = $region8
    $region5: #{tpu_custom_call.1} parent=1 // loop_body
      %s27 = ssub.s32 %s22, 1
      %s28 = ssub.s32 %s22, 2
      %s35 = sadd.s32 1, %s30
      %p36 = scmp.ge.s32.totalorder %s35, 1
      %s37 = scalar_select %p36, 0, %s35
      %s38 = sadd.s32 1, %s29
      %s39 = scalar_select %p36, %s38, %s29
      %p40 = scmp.ge.s32.totalorder %s39, 2
      %s41 = scalar_select %p40, 0, %s39
      %s42 = ssub.s32 %s29, %s41
      %s43 = ssub.s32 %s30, %s37
      %s44 = sor.u32 %s42, %s43
      %p45 = scmp.eq.s32.totalorder %s44, 0
      %s47 = sadd.s32 %s46, 1
      %s48 = scalar_select %p45, %s46, %s47
      %p51 = pneg %p45
      %p52 = scmp.eq.s32.totalorder %s22, 1
      %p53 = por %p51, %p52
      %p54 = scmp.ne.s32.totalorder %s46, %s49
      %p55 = scmp.eq.s32.totalorder %s22, 0
      %p56 = por %p54, %p55
      %p57 = scmp.ne.s32.totalorder %s46, %s49
      %p58 = scmp.eq.s32.totalorder %s27, 1
      %p59 = por %p57, %p58
      %p60 = scmp.ne.s32.totalorder %s49, %s50
      %p61 = scmp.eq.s32.totalorder %s27, 0
      %p62 = por %p60, %p61
      %p63 = scmp.ne.s32.totalorder %s49, %s50
      %p64 = scmp.eq.s32.totalorder %s28, 1
      %p65 = por %p63, %p64
      %p67 = scmp.ne.s32.totalorder %s50, %s66
      %p68 = scmp.eq.s32.totalorder %s28, 0
      %p69 = por %p67, %p68
      %s71 = sadd.s32 %s70, 1
      %p74 = scmp.eq.s32.totalorder %s22, 1
      %p75 = scmp.ne.s32.totalorder %s70, %s72
      %p76 = scmp.eq.s32.totalorder %s22, 0
      %p77 = por %p75, %p76
      %p78 = scmp.ne.s32.totalorder %s70, %s72
      %p79 = scmp.eq.s32.totalorder %s27, 1
      %p80 = por %p78, %p79
      %p81 = scmp.ne.s32.totalorder %s72, %s73
      %p82 = scmp.eq.s32.totalorder %s27, 0
      %p83 = por %p81, %p82
      %p84 = scmp.ne.s32.totalorder %s72, %s73
      %p85 = scmp.eq.s32.totalorder %s28, 1
      %p86 = por %p84, %p85
      %p88 = scmp.ne.s32.totalorder %s73, %s87
      %p89 = scmp.eq.s32.totalorder %s28, 0
      %p90 = por %p88, %p89
      %s92 = sadd.s32 %s91, 1
      %p95 = scmp.eq.s32.totalorder %s22, 1
      %p96 = scmp.ne.s32.totalorder %s91, %s93
      %p97 = scmp.eq.s32.totalorder %s22, 0
      %p98 = por %p96, %p97
      %p99 = scmp.ne.s32.totalorder %s91, %s93
      %p100 = scmp.eq.s32.totalorder %s27, 1
      %p101 = por %p99, %p100
      %p102 = scmp.ne.s32.totalorder %s93, %s94
      %p103 = scmp.eq.s32.totalorder %s27, 0
      %p104 = por %p102, %p103
      %p105 = scmp.ne.s32.totalorder %s93, %s94
      %p106 = scmp.eq.s32.totalorder %s28, 1
      %p107 = por %p105, %p106
      %p109 = scmp.ne.s32.totalorder %s94, %s108
      %p110 = scmp.eq.s32.totalorder %s28, 0
      %p111 = por %p109, %p110
      %s113 = sadd.s32 %s112, 1
      %p116 = scmp.eq.s32.totalorder %s22, 1
      %p117 = scmp.ne.s32.totalorder %s112, %s114
      %p118 = scmp.eq.s32.totalorder %s22, 0
      %p119 = por %p117, %p118
      %p120 = scmp.ne.s32.totalorder %s112, %s114
      %p121 = scmp.eq.s32.totalorder %s27, 1
      %p122 = por %p120, %p121
      %p123 = scmp.ne.s32.totalorder %s114, %s115
      %p124 = scmp.eq.s32.totalorder %s27, 0
      %p125 = por %p123, %p124
      %p126 = scmp.ne.s32.totalorder %s114, %s115
      %p127 = scmp.eq.s32.totalorder %s28, 1
      %p128 = por %p126, %p127
      %p130 = scmp.ne.s32.totalorder %s115, %s129
      %p131 = scmp.eq.s32.totalorder %s28, 0
      %p132 = por %p130, %p131
      %s133 = ssub.s32 %s29, %s41
      %s134 = ssub.s32 %s30, %s37
      %s135 = sor.u32 %s133, %s134
      %p136 = scmp.eq.s32.totalorder %s135, 0
      %s138 = sadd.s32 %s137, 1
      %s139 = scalar_select %p136, %s137, %s138
      %p142 = pneg %p136
      %p143 = scmp.eq.s32.totalorder %s22, 1
      %p144 = por %p142, %p143
      %p145 = scmp.ne.s32.totalorder %s137, %s140
      %p146 = scmp.eq.s32.totalorder %s22, 0
      %p147 = por %p145, %p146
      %p148 = scmp.ne.s32.totalorder %s137, %s140
      %p149 = scmp.eq.s32.totalorder %s27, 1
      %p150 = por %p148, %p149
      %p151 = scmp.ne.s32.totalorder %s140, %s141
      %p152 = scmp.eq.s32.totalorder %s27, 0
      %p153 = por %p151, %p152
      %p154 = scmp.ne.s32.totalorder %s140, %s141
      %p155 = scmp.eq.s32.totalorder %s28, 1
      %p156 = por %p154, %p155
      %p158 = scmp.ne.s32.totalorder %s141, %s157
      %p159 = scmp.eq.s32.totalorder %s28, 0
      %p160 = por %p158, %p159
      %s161 = ssub.s32 %s29, %s41
      %s162 = ssub.s32 %s30, %s37
      %s163 = sor.u32 %s161, %s162
      %p164 = scmp.eq.s32.totalorder %s163, 0
      %s166 = sadd.s32 %s165, 1
      %s167 = scalar_select %p164, %s165, %s166
      %p170 = pneg %p164
      %p171 = scmp.eq.s32.totalorder %s22, 1
      %p172 = por %p170, %p171
      %p173 = scmp.ne.s32.totalorder %s165, %s168
      %p174 = scmp.eq.s32.totalorder %s22, 0
      %p175 = por %p173, %p174
      %p176 = scmp.ne.s32.totalorder %s165, %s168
      %p177 = scmp.eq.s32.totalorder %s27, 1
      %p178 = por %p176, %p177
      %p179 = scmp.ne.s32.totalorder %s168, %s169
      %p180 = scmp.eq.s32.totalorder %s27, 0
      %p181 = por %p179, %p180
      %p182 = scmp.ne.s32.totalorder %s168, %s169
      %p183 = scmp.eq.s32.totalorder %s28, 1
      %p184 = por %p182, %p183
      %p186 = scmp.ne.s32.totalorder %s169, %s185
      %p187 = scmp.eq.s32.totalorder %s28, 0
      %p188 = por %p186, %p187
      %p189 = scmp.le.s32.totalorder 1, %s22
      %p190 = scmp.lt.s32.totalorder %s22, 3
      %p191 = pnand %p189, %p190
      %p192 = pneg %p191
      // Predicated region
      $region9: #{tpu_custom_call.1} parent=5 // pred_check
        _
      $region10: #{tpu_custom_call.1} parent=5 // pred_check_branch
        %194 = sbr.rel (%p191) target = $region12
      $region11: #{tpu_custom_call.1} parent=5 // pred_region
        %s195 = ssub.s32 %s22, 1
        // Predicated region
        $region13: #{tpu_custom_call.1} parent=11 // pred_check
          %p196 = pneg %p83
        $region14: #{tpu_custom_call.1} parent=11 // pred_check_branch
          %198 = sbr.rel (%p196) target = $region16
        $region15: #{tpu_custom_call.1} parent=11 // pred_region
          %s200 = ssub.s32 512, 512
          %201 = vsyncadd [#allocation6], %s200
          %s202 = sshll.u32 [#allocation5], 4
          %s203 = int_to_ptr.vmem [resolvable:$true] %s202
          %208 = dma.hbm_to_vmem [thread:$0]  %s1, 512, %s203, [#allocation6], 256, 256, 16
        $region16: #{tpu_custom_call.1} parent=11 // pred_fallthru
          _
        // Predicated region
        $region17: #{tpu_custom_call.1} parent=11 // pred_check
          %p209 = pneg %p104
        $region18: #{tpu_custom_call.1} parent=11 // pred_check_branch
          %211 = sbr.rel (%p209) target = $region20
        $region19: #{tpu_custom_call.1} parent=11 // pred_region
          %s213 = ssub.s32 128, 128
          %214 = vsyncadd [#allocation6], %s213
          %s216 = sshll.u32 [#allocation7], 4
          %s217 = int_to_ptr.vmem [resolvable:$true] %s216
          %219 = dma.hbm_to_vmem [thread:$0]  %s2, 128, %s217, [#allocation6]
        $region20: #{tpu_custom_call.1} parent=11 // pred_fallthru
          _
        // Predicated region
        $region21: #{tpu_custom_call.1} parent=11 // pred_check
          %p220 = pneg %p125
        $region22: #{tpu_custom_call.1} parent=11 // pred_check_branch
          %222 = sbr.rel (%p220) target = $region24
        $region23: #{tpu_custom_call.1} parent=11 // pred_region
          _
        $region24: #{tpu_custom_call.1} parent=11 // pred_fallthru
          _
      $region12: #{tpu_custom_call.1} parent=5 // pred_fallthru
        _
      %p223 = scmp.lt.s32.totalorder %s22, 2
      // Predicated region
      $region25: #{tpu_custom_call.1} parent=5 // pred_check
        %p224 = pneg %p223
      $region26: #{tpu_custom_call.1} parent=5 // pred_check_branch
        %226 = sbr.rel (%p224) target = $region28
      $region27: #{tpu_custom_call.1} parent=5 // pred_region
        // Predicated region
        $region29: #{tpu_custom_call.1} parent=27 // pred_check
          %p227 = pneg %p56
        $region30: #{tpu_custom_call.1} parent=27 // pred_check_branch
          %229 = sbr.rel (%p227) target = $region32
        $region31: #{tpu_custom_call.1} parent=27 // pred_region
          %s230 = sand.u32 %s46, 1
          %s231 = scalar_lea.sflag [#allocation3], %s230
          %s232 = sand.u32 %s46, 1
          %s233 = smul.addr %s232, 64
          %s234 = scalar_lea.vmem [#allocation2], %s233
          %s235 = smul.u32 4, %s30
          %s237 = ssub.s32 1024, 1024
          %238 = vsyncadd %s231, %s237
          %s239 = smul.addr %s235, 2
          %s240 = smul.addr %s29, 8
          %s241 = sadd.s32 %s239, %s240
          %s242 = smul.addr %s241, 128
          %s243 = scalar_lea.hbm %s0, %s242
          %s244 = sshll.u32 %s234, 4
          %s245 = int_to_ptr.vmem [resolvable:$true] %s244
          %250 = dma.hbm_to_vmem [thread:$0]  %s243, 1024, %s245, %s231, 128, 128, 8
        $region32: #{tpu_custom_call.1} parent=27 // pred_fallthru
          _
      $region28: #{tpu_custom_call.1} parent=5 // pred_fallthru
        _
      %p251 = scmp.le.s32.totalorder 1, %s22
      %p252 = scmp.lt.s32.totalorder %s22, 3
      %p253 = pnand %p251, %p252
      %p254 = pneg %p253
      // Predicated region
      $region33: #{tpu_custom_call.1} parent=5 // pred_check
        _
      $region34: #{tpu_custom_call.1} parent=5 // pred_check_branch
        %256 = sbr.rel (%p253) target = $region36
      $region35: #{tpu_custom_call.1} parent=5 // pred_region
        %s257 = ssub.s32 %s22, 1
        %s258 = sand.u32 %s49, 1
        %s259 = scalar_lea.sflag [#allocation3], %s258
        %s260 = sand.u32 %s49, 1
        %s261 = smul.addr %s260, 64
        %s262 = scalar_lea.vmem [#allocation2], %s261
        // Predicated region
        $region37: #{tpu_custom_call.1} parent=35 // pred_check
          %p263 = pneg %p62
        $region38: #{tpu_custom_call.1} parent=35 // pred_check_branch
          %265 = sbr.rel (%p263) target = $region40
        $region39: #{tpu_custom_call.1} parent=35 // pred_region
          %266 = dma.done %s259, 1024
        $region40: #{tpu_custom_call.1} parent=35 // pred_fallthru
          _
        // Predicated region
        $region41: #{tpu_custom_call.1} parent=35 // pred_check
          %p267 = pneg %p83
        $region42: #{tpu_custom_call.1} parent=35 // pred_check_branch
          %269 = sbr.rel (%p267) target = $region44
        $region43: #{tpu_custom_call.1} parent=35 // pred_region
          %270 = dma.done [#allocation6], 512
        $region44: #{tpu_custom_call.1} parent=35 // pred_fallthru
          _
        // Predicated region
        $region45: #{tpu_custom_call.1} parent=35 // pred_check
          %p271 = pneg %p104
        $region46: #{tpu_custom_call.1} parent=35 // pred_check_branch
          %273 = sbr.rel (%p271) target = $region48
        $region47: #{tpu_custom_call.1} parent=35 // pred_region
          %274 = dma.done [#allocation6], 128
        $region48: #{tpu_custom_call.1} parent=35 // pred_fallthru
          _
        %s275 = sand.u32 %s49, 1
        %s276 = scalar_lea.sflag [#allocation3], %s275
        %s277 = sand.u32 %s49, 1
        %s278 = smul.addr %s277, 64
        %s279 = scalar_lea.vmem [#allocation2], %s278
        %p280 = pneg %p62
        %p281 = pneg %p59
        %p282 = pneg %p83
        %p283 = pneg %p80
        %p284 = pneg %p104
        %p285 = pneg %p101
        %p286 = pneg %p125
        %p287 = pneg %p122
        %p288 = pneg %p153
        %p289 = pneg %p150
        %s290 = sand.u32 %s140, 1
        %s291 = scalar_lea.sflag [#allocation4], %s290
        %s292 = sand.u32 %s140, 1
        %s293 = smul.addr %s292, 32
        %s294 = scalar_lea.vmem [#allocation8], %s293
        %p295 = pneg %p181
        %p296 = pneg %p178
        %s297 = sand.u32 %s168, 1
        %s298 = scalar_lea.sflag [#allocation10], %s297
        %s299 = sand.u32 %s168, 1
        %s300 = smul.addr %s299, 16
        %s301 = scalar_lea.vmem [#allocation9], %s300
        %s302 = smul.u32 4, %s32
        %s303 = smul.u32 4, %s32
        %s304 = smul.u32 4, %s32
        %v305 = vld [vmem:[%s262] sm:$0xff]
        %v306 = vld [vmem:[%s262 + $0x8] sm:$0xff]
        %v307 = vld [vmem:[%s262 + $0x10] sm:$0xff]
        %v308 = vld [vmem:[%s262 + $0x18] sm:$0xff]
        %v309 = vld [vmem:[%s262 + $0x20] sm:$0xff]
        %v310 = vld [vmem:[%s262 + $0x28] sm:$0xff]
        %v311 = vld [vmem:[%s262 + $0x30] sm:$0xff]
        %v312 = vld [vmem:[%s262 + $0x38] sm:$0xff]
        %v313 = vld [vmem:[#allocation5] sm:$0xff]
        %v314 = vld [vmem:[#allocation5 + $0x8] sm:$0xff]
        %v315 = vld [vmem:[#allocation5 + $0x10] sm:$0xff]
        %v316 = vld [vmem:[#allocation5 + $0x18] sm:$0xff]
        %vm317 = vcmask 130048
        %v319 = vsel %vm317, %v305, 0
        %v322 = vsel %vm317, %v306, 0
        %v325 = vsel %vm317, %v307, 0
        %v328 = vsel %vm317, %v308, 0
        %v331 = vsel %vm317, %v309, 0
        %v334 = vsel %vm317, %v310, 0
        %v337 = vsel %vm317, %v311, 0
        %v340 = vsel %vm317, %v312, 0
        %342 = vmatprep.subr.mxu0 0.0
        %343 = vmatpush1.msra.mxu0 0.0
        %344 = vmatprep.subr.mxu0 0.0
        %345 = vmatpush1.msra.mxu0 0.0
        %346 = vmatprep.subr.mxu0 0.0
        %347 = vmatpush1.msra.mxu0 0.0
        %348 = vmatprep.subr.mxu0 0.0
        %349 = vmatpush1.msra.mxu0 0.0
        %350 = vmatprep.subr.mxu0 0.0
        %351 = vmatpush1.msra.mxu0 0.0
        %352 = vmatprep.subr.mxu0 0.0
        %353 = vmatpush1.msra.mxu0 0.0
        %354 = vmatprep.subr.mxu0 0.0
        %355 = vmatpush1.msra.mxu0 0.0
        %356 = vmatprep.subr.mxu0 0.0
        %357 = vmatpush1.msra.mxu0 0.0
        %358 = vmatprep.subr.mxu0 0.0
        %359 = vmatpush1.msra.mxu0 0.0
        %360 = vmatprep.subr.mxu0 0.0
        %361 = vmatpush1.msra.mxu0 0.0
        %362 = vmatprep.subr.mxu0 0.0
        %363 = vmatpush1.msra.mxu0 0.0
        %364 = vmatprep.subr.mxu0 0.0
        %365 = vmatpush1.msra.mxu0 0.0
        %366 = vmatprep.subr.mxu0 0.0
        %367 = vmatpush1.msra.mxu0 0.0
        %368 = vmatprep.subr.mxu0 0.0
        %369 = vmatpush1.msra.mxu0 0.0
        %370 = vmatprep.subr.mxu0 %v316
        %371 = vmatpush1.msra.mxu0 %v315
        %372 = vmatprep.subr.mxu0 %v314
        %373 = vmatpush1.msra.mxu0 %v313
        %374 = vmatprep.subr.mxu0 0.0
        %375 = vmatpush2.msra.mxu0 0.0
        %376 = vmatprep.subr.mxu0 0.0
        %377 = vmatpush2.msra.mxu0 0.0
        %378 = vmatprep.subr.mxu0 0.0
        %379 = vmatpush2.msra.mxu0 0.0
        %380 = vmatprep.subr.mxu0 0.0
        %381 = vmatpush2.msra.mxu0 0.0
        %382 = vmatprep.subr.mxu0 0.0
        %383 = vmatpush2.msra.mxu0 0.0
        %384 = vmatprep.subr.mxu0 0.0
        %385 = vmatpush2.msra.mxu0 0.0
        %386 = vmatprep.subr.mxu0 0.0
        %387 = vmatpush2.msra.mxu0 0.0
        %388 = vmatprep.subr.mxu0 0.0
        %389 = vmatpush2.msra.mxu0 0.0
        %390 = vmatprep.subr.mxu0 0.0
        %391 = vmatpush2.msra.mxu0 0.0
        %392 = vmatprep.subr.mxu0 0.0
        %393 = vmatpush2.msra.mxu0 0.0
        %394 = vmatprep.subr.mxu0 0.0
        %395 = vmatpush2.msra.mxu0 0.0
        %396 = vmatprep.subr.mxu0 0.0
        %397 = vmatpush2.msra.mxu0 0.0
        %398 = vmatprep.subr.mxu0 0.0
        %399 = vmatpush2.msra.mxu0 0.0
        %400 = vmatprep.subr.mxu0 0.0
        %401 = vmatpush2.msra.mxu0 0.0
        %402 = vmatprep.subr.mxu0 0.0
        %403 = vmatpush2.msra.mxu0 0.0
        %404 = vmatprep.subr.mxu0 0.0
        %405 = vmatpush2.msra.mxu0 0.0
        %406 = vmatprep.mubr.f32.mxu0 0.0
        %407 = vmatmul.mubr.f32.gmra.mxu0 %v319
        %v408 = vpop.f32.mrf.mxu0
        %v409 = vadd.f32 0.0, %v408
        %v410 = vpop.f32.mrf.mxu0
        %v411 = vadd.f32 0.0, %v410
        %412 = vmatprep.mubr.f32.mxu0 0.0
        %413 = vmatmul.mubr.f32.gmra.mxu0 %v322
        %v414 = vpop.f32.mrf.mxu0
        %v415 = vadd.f32 0.0, %v414
        %v416 = vpop.f32.mrf.mxu0
        %v417 = vadd.f32 0.0, %v416
        %418 = vmatprep.mubr.f32.mxu0 0.0
        %419 = vmatmul.mubr.f32.gmra.mxu0 %v325
        %v420 = vpop.f32.mrf.mxu0
        %v421 = vadd.f32 0.0, %v420
        %v422 = vpop.f32.mrf.mxu0
        %v423 = vadd.f32 0.0, %v422
        %424 = vmatprep.mubr.f32.mxu0 0.0
        %425 = vmatmul.mubr.f32.gmra.mxu0 %v328
        %v426 = vpop.f32.mrf.mxu0
        %v427 = vadd.f32 0.0, %v426
        %v428 = vpop.f32.mrf.mxu0
        %v429 = vadd.f32 0.0, %v428
        %430 = vmatprep.mubr.f32.mxu0 0.0
        %431 = vmatmul.mubr.f32.gmra.mxu0 %v331
        %v432 = vpop.f32.mrf.mxu0
        %v433 = vadd.f32 0.0, %v432
        %v434 = vpop.f32.mrf.mxu0
        %v435 = vadd.f32 0.0, %v434
        %436 = vmatprep.mubr.f32.mxu0 0.0
        %437 = vmatmul.mubr.f32.gmra.mxu0 %v334
        %v438 = vpop.f32.mrf.mxu0
        %v439 = vadd.f32 0.0, %v438
        %v440 = vpop.f32.mrf.mxu0
        %v441 = vadd.f32 0.0, %v440
        %442 = vmatprep.mubr.f32.mxu0 0.0
        %443 = vmatmul.mubr.f32.gmra.mxu0 %v337
        %v444 = vpop.f32.mrf.mxu0
        %v445 = vadd.f32 0.0, %v444
        %v446 = vpop.f32.mrf.mxu0
        %v447 = vadd.f32 0.0, %v446
        %448 = vmatprep.mubr.f32.mxu0 0.0
        %449 = vmatmul.mubr.f32.gmra.mxu0 %v340
        %v450 = vpop.f32.mrf.mxu0
        %v451 = vadd.f32 0.0, %v450
        %v452 = vpop.f32.mrf.mxu0
        %v453 = vadd.f32 0.0, %v452
        %454 = vdwg.mxu0
        %v455 = vld [vmem:[#allocation7] sm:$0xff]
        %v457 = vsel %vm317, %v455, 0
        %459 = vmatprep.subr.mxu0 0.0
        %460 = vmatpush1.msra.mxu0 0.0
        %461 = vmatprep.subr.mxu0 0.0
        %462 = vmatpush1.msra.mxu0 0.0
        %463 = vmatprep.subr.mxu0 0.0
        %464 = vmatpush1.msra.mxu0 0.0
        %465 = vmatprep.subr.mxu0 0.0
        %466 = vmatpush1.msra.mxu0 0.0
        %467 = vmatprep.subr.mxu0 0.0
        %468 = vmatpush1.msra.mxu0 0.0
        %469 = vmatprep.subr.mxu0 0.0
        %470 = vmatpush1.msra.mxu0 0.0
        %471 = vmatprep.subr.mxu0 0.0
        %472 = vmatpush1.msra.mxu0 0.0
        %473 = vmatprep.subr.mxu0 0.0
        %474 = vmatpush1.msra.mxu0 0.0
        %475 = vmatprep.subr.mxu0 0.0
        %476 = vmatpush1.msra.mxu0 0.0
        %477 = vmatprep.subr.mxu0 0.0
        %478 = vmatpush1.msra.mxu0 0.0
        %479 = vmatprep.subr.mxu0 0.0
        %480 = vmatpush1.msra.mxu0 0.0
        %481 = vmatprep.subr.mxu0 0.0
        %482 = vmatpush1.msra.mxu0 0.0
        %483 = vmatprep.subr.mxu0 0.0
        %484 = vmatpush1.msra.mxu0 0.0
        %485 = vmatprep.subr.mxu0 0.0
        %486 = vmatpush1.msra.mxu0 0.0
        %487 = vmatprep.subr.mxu0 0.0
        %488 = vmatpush1.msra.mxu0 %v415
        %489 = vmatprep.subr.mxu0 0.0
        %490 = vmatpush1.msra.mxu0 %v409
        %491 = vmatprep.subr.mxu0 0.0
        %492 = vmatpush2.msra.mxu0 0.0
        %493 = vmatprep.subr.mxu0 0.0
        %494 = vmatpush2.msra.mxu0 0.0
        %495 = vmatprep.subr.mxu0 0.0
        %496 = vmatpush2.msra.mxu0 0.0
        %497 = vmatprep.subr.mxu0 0.0
        %498 = vmatpush2.msra.mxu0 0.0
        %499 = vmatprep.subr.mxu0 0.0
        %500 = vmatpush2.msra.mxu0 0.0
        %501 = vmatprep.subr.mxu0 0.0
        %502 = vmatpush2.msra.mxu0 0.0
        %503 = vmatprep.subr.mxu0 0.0
        %504 = vmatpush2.msra.mxu0 0.0
        %505 = vmatprep.subr.mxu0 0.0
        %506 = vmatpush2.msra.mxu0 0.0
        %507 = vmatprep.subr.mxu0 0.0
        %508 = vmatpush2.msra.mxu0 0.0
        %509 = vmatprep.subr.mxu0 0.0
        %510 = vmatpush2.msra.mxu0 0.0
        %511 = vmatprep.subr.mxu0 0.0
        %512 = vmatpush2.msra.mxu0 0.0
        %513 = vmatprep.subr.mxu0 0.0
        %514 = vmatpush2.msra.mxu0 0.0
        %515 = vmatprep.subr.mxu0 0.0
        %516 = vmatpush2.msra.mxu0 0.0
        %517 = vmatprep.subr.mxu0 0.0
        %518 = vmatpush2.msra.mxu0 0.0
        %519 = vmatprep.subr.mxu0 0.0
        %520 = vmatpush2.msra.mxu0 0.0
        %521 = vmatprep.subr.mxu0 0.0
        %522 = vmatpush2.msra.mxu0 0.0
        %523 = vmatprep.mubr.f32.mxu0 0.0
        %524 = vmatmul.mubr.f32.gmra.mxu0 %v457
        %v525 = vpop.f32.mrf.mxu0
        %v526 = vadd.f32 0.0, %v525
        %v527 = vpop.f32.mrf.mxu0
        %528 = vdwg.mxu0
        %vm529 = vcmask 64512
        %530 = vst.msk [vmem:[%s294] sm:$0xff] %vm529, %v526
        %531 = vmatprep.subr.mxu0 0.0
        %532 = vmatpush1.msra.mxu0 0.0
        %533 = vmatprep.subr.mxu0 0.0
        %534 = vmatpush1.msra.mxu0 0.0
        %535 = vmatprep.subr.mxu0 0.0
        %536 = vmatpush1.msra.mxu0 0.0
        %537 = vmatprep.subr.mxu0 0.0
        %538 = vmatpush1.msra.mxu0 0.0
        %539 = vmatprep.subr.mxu0 0.0
        %540 = vmatpush1.msra.mxu0 0.0
        %541 = vmatprep.subr.mxu0 0.0
        %542 = vmatpush1.msra.mxu0 0.0
        %543 = vmatprep.subr.mxu0 0.0
        %544 = vmatpush1.msra.mxu0 0.0
        %545 = vmatprep.subr.mxu0 0.0
        %546 = vmatpush1.msra.mxu0 0.0
        %547 = vmatprep.subr.mxu0 0.0
        %548 = vmatpush1.msra.mxu0 0.0
        %549 = vmatprep.subr.mxu0 0.0
        %550 = vmatpush1.msra.mxu0 0.0
        %551 = vmatprep.subr.mxu0 0.0
        %552 = vmatpush1.msra.mxu0 0.0
        %553 = vmatprep.subr.mxu0 0.0
        %554 = vmatpush1.msra.mxu0 0.0
        %555 = vmatprep.subr.mxu0 0.0
        %556 = vmatpush1.msra.mxu0 0.0
        %557 = vmatprep.subr.mxu0 0.0
        %558 = vmatpush1.msra.mxu0 0.0
        %559 = vmatprep.subr.mxu0 0.0
        %560 = vmatpush1.msra.mxu0 %v427
        %561 = vmatprep.subr.mxu0 0.0
        %562 = vmatpush1.msra.mxu0 %v421
        %563 = vmatprep.subr.mxu0 0.0
        %564 = vmatpush2.msra.mxu0 0.0
        %565 = vmatprep.subr.mxu0 0.0
        %566 = vmatpush2.msra.mxu0 0.0
        %567 = vmatprep.subr.mxu0 0.0
        %568 = vmatpush2.msra.mxu0 0.0
        %569 = vmatprep.subr.mxu0 0.0
        %570 = vmatpush2.msra.mxu0 0.0
        %571 = vmatprep.subr.mxu0 0.0
        %572 = vmatpush2.msra.mxu0 0.0
        %573 = vmatprep.subr.mxu0 0.0
        %574 = vmatpush2.msra.mxu0 0.0
        %575 = vmatprep.subr.mxu0 0.0
        %576 = vmatpush2.msra.mxu0 0.0
        %577 = vmatprep.subr.mxu0 0.0
        %578 = vmatpush2.msra.mxu0 0.0
        %579 = vmatprep.subr.mxu0 0.0
        %580 = vmatpush2.msra.mxu0 0.0
        %581 = vmatprep.subr.mxu0 0.0
        %582 = vmatpush2.msra.mxu0 0.0
        %583 = vmatprep.subr.mxu0 0.0
        %584 = vmatpush2.msra.mxu0 0.0
        %585 = vmatprep.subr.mxu0 0.0
        %586 = vmatpush2.msra.mxu0 0.0
        %587 = vmatprep.subr.mxu0 0.0
        %588 = vmatpush2.msra.mxu0 0.0
        %589 = vmatprep.subr.mxu0 0.0
        %590 = vmatpush2.msra.mxu0 0.0
        %591 = vmatprep.subr.mxu0 0.0
        %592 = vmatpush2.msra.mxu0 0.0
        %593 = vmatprep.subr.mxu0 0.0
        %594 = vmatpush2.msra.mxu0 0.0
        %595 = vmatprep.mubr.f32.mxu0 0.0
        %596 = vmatmul.mubr.f32.gmra.mxu0 %v457
        %v597 = vpop.f32.mrf.mxu0
        %v598 = vadd.f32 0.0, %v597
        %v599 = vpop.f32.mrf.mxu0
        %600 = vdwg.mxu0
        %s601 = scalar_lea.vmem %s294, 8 [#allocation8]
        %602 = vst.msk [vmem:[%s601] sm:$0xff] %vm529, %v598
        %603 = vmatprep.subr.mxu0 0.0
        %604 = vmatpush1.msra.mxu0 0.0
        %605 = vmatprep.subr.mxu0 0.0
        %606 = vmatpush1.msra.mxu0 0.0
        %607 = vmatprep.subr.mxu0 0.0
        %608 = vmatpush1.msra.mxu0 0.0
        %609 = vmatprep.subr.mxu0 0.0
        %610 = vmatpush1.msra.mxu0 0.0
        %611 = vmatprep.subr.mxu0 0.0
        %612 = vmatpush1.msra.mxu0 0.0
        %613 = vmatprep.subr.mxu0 0.0
        %614 = vmatpush1.msra.mxu0 0.0
        %615 = vmatprep.subr.mxu0 0.0
        %616 = vmatpush1.msra.mxu0 0.0
        %617 = vmatprep.subr.mxu0 0.0
        %618 = vmatpush1.msra.mxu0 0.0
        %619 = vmatprep.subr.mxu0 0.0
        %620 = vmatpush1.msra.mxu0 0.0
        %621 = vmatprep.subr.mxu0 0.0
        %622 = vmatpush1.msra.mxu0 0.0
        %623 = vmatprep.subr.mxu0 0.0
        %624 = vmatpush1.msra.mxu0 0.0
        %625 = vmatprep.subr.mxu0 0.0
        %626 = vmatpush1.msra.mxu0 0.0
        %627 = vmatprep.subr.mxu0 0.0
        %628 = vmatpush1.msra.mxu0 0.0
        %629 = vmatprep.subr.mxu0 0.0
        %630 = vmatpush1.msra.mxu0 0.0
        %631 = vmatprep.subr.mxu0 0.0
        %632 = vmatpush1.msra.mxu0 %v439
        %633 = vmatprep.subr.mxu0 0.0
        %634 = vmatpush1.msra.mxu0 %v433
        %635 = vmatprep.subr.mxu0 0.0
        %636 = vmatpush2.msra.mxu0 0.0
        %637 = vmatprep.subr.mxu0 0.0
        %638 = vmatpush2.msra.mxu0 0.0
        %639 = vmatprep.subr.mxu0 0.0
        %640 = vmatpush2.msra.mxu0 0.0
        %641 = vmatprep.subr.mxu0 0.0
        %642 = vmatpush2.msra.mxu0 0.0
        %643 = vmatprep.subr.mxu0 0.0
        %644 = vmatpush2.msra.mxu0 0.0
        %645 = vmatprep.subr.mxu0 0.0
        %646 = vmatpush2.msra.mxu0 0.0
        %647 = vmatprep.subr.mxu0 0.0
        %648 = vmatpush2.msra.mxu0 0.0
        %649 = vmatprep.subr.mxu0 0.0
        %650 = vmatpush2.msra.mxu0 0.0
        %651 = vmatprep.subr.mxu0 0.0
        %652 = vmatpush2.msra.mxu0 0.0
        %653 = vmatprep.subr.mxu0 0.0
        %654 = vmatpush2.msra.mxu0 0.0
        %655 = vmatprep.subr.mxu0 0.0
        %656 = vmatpush2.msra.mxu0 0.0
        %657 = vmatprep.subr.mxu0 0.0
        %658 = vmatpush2.msra.mxu0 0.0
        %659 = vmatprep.subr.mxu0 0.0
        %660 = vmatpush2.msra.mxu0 0.0
        %661 = vmatprep.subr.mxu0 0.0
        %662 = vmatpush2.msra.mxu0 0.0
        %663 = vmatprep.subr.mxu0 0.0
        %664 = vmatpush2.msra.mxu0 0.0
        %665 = vmatprep.subr.mxu0 0.0
        %666 = vmatpush2.msra.mxu0 0.0
        %667 = vmatprep.mubr.f32.mxu0 0.0
        %668 = vmatmul.mubr.f32.gmra.mxu0 %v457
        %v669 = vpop.f32.mrf.mxu0
        %v670 = vadd.f32 0.0, %v669
        %v671 = vpop.f32.mrf.mxu0
        %672 = vdwg.mxu0
        %s673 = scalar_lea.vmem %s294, 16 [#allocation8]
        %674 = vst.msk [vmem:[%s673] sm:$0xff] %vm529, %v670
        %675 = vmatprep.subr.mxu0 0.0
        %676 = vmatpush1.msra.mxu0 0.0
        %677 = vmatprep.subr.mxu0 0.0
        %678 = vmatpush1.msra.mxu0 0.0
        %679 = vmatprep.subr.mxu0 0.0
        %680 = vmatpush1.msra.mxu0 0.0
        %681 = vmatprep.subr.mxu0 0.0
        %682 = vmatpush1.msra.mxu0 0.0
        %683 = vmatprep.subr.mxu0 0.0
        %684 = vmatpush1.msra.mxu0 0.0
        %685 = vmatprep.subr.mxu0 0.0
        %686 = vmatpush1.msra.mxu0 0.0
        %687 = vmatprep.subr.mxu0 0.0
        %688 = vmatpush1.msra.mxu0 0.0
        %689 = vmatprep.subr.mxu0 0.0
        %690 = vmatpush1.msra.mxu0 0.0
        %691 = vmatprep.subr.mxu0 0.0
        %692 = vmatpush1.msra.mxu0 0.0
        %693 = vmatprep.subr.mxu0 0.0
        %694 = vmatpush1.msra.mxu0 0.0
        %695 = vmatprep.subr.mxu0 0.0
        %696 = vmatpush1.msra.mxu0 0.0
        %697 = vmatprep.subr.mxu0 0.0
        %698 = vmatpush1.msra.mxu0 0.0
        %699 = vmatprep.subr.mxu0 0.0
        %700 = vmatpush1.msra.mxu0 0.0
        %701 = vmatprep.subr.mxu0 0.0
        %702 = vmatpush1.msra.mxu0 0.0
        %703 = vmatprep.subr.mxu0 0.0
        %704 = vmatpush1.msra.mxu0 %v451
        %705 = vmatprep.subr.mxu0 0.0
        %706 = vmatpush1.msra.mxu0 %v445
        %707 = vmatprep.subr.mxu0 0.0
        %708 = vmatpush2.msra.mxu0 0.0
        %709 = vmatprep.subr.mxu0 0.0
        %710 = vmatpush2.msra.mxu0 0.0
        %711 = vmatprep.subr.mxu0 0.0
        %712 = vmatpush2.msra.mxu0 0.0
        %713 = vmatprep.subr.mxu0 0.0
        %714 = vmatpush2.msra.mxu0 0.0
        %715 = vmatprep.subr.mxu0 0.0
        %716 = vmatpush2.msra.mxu0 0.0
        %717 = vmatprep.subr.mxu0 0.0
        %718 = vmatpush2.msra.mxu0 0.0
        %719 = vmatprep.subr.mxu0 0.0
        %720 = vmatpush2.msra.mxu0 0.0
        %721 = vmatprep.subr.mxu0 0.0
        %722 = vmatpush2.msra.mxu0 0.0
        %723 = vmatprep.subr.mxu0 0.0
        %724 = vmatpush2.msra.mxu0 0.0
        %725 = vmatprep.subr.mxu0 0.0
        %726 = vmatpush2.msra.mxu0 0.0
        %727 = vmatprep.subr.mxu0 0.0
        %728 = vmatpush2.msra.mxu0 0.0
        %729 = vmatprep.subr.mxu0 0.0
        %730 = vmatpush2.msra.mxu0 0.0
        %731 = vmatprep.subr.mxu0 0.0
        %732 = vmatpush2.msra.mxu0 0.0
        %733 = vmatprep.subr.mxu0 0.0
        %734 = vmatpush2.msra.mxu0 0.0
        %735 = vmatprep.subr.mxu0 0.0
        %736 = vmatpush2.msra.mxu0 0.0
        %737 = vmatprep.subr.mxu0 0.0
        %738 = vmatpush2.msra.mxu0 0.0
        %739 = vmatprep.mubr.f32.mxu0 0.0
        %740 = vmatmul.mubr.f32.gmra.mxu0 %v457
        %v741 = vpop.f32.mrf.mxu0
        %v742 = vadd.f32 0.0, %v741
        %v743 = vpop.f32.mrf.mxu0
        %744 = vdwg.mxu0
        %s745 = scalar_lea.vmem %s294, 24 [#allocation8]
        %746 = vst.msk [vmem:[%s745] sm:$0xff] %vm529, %v742
        %v747 = vld [vmem:[%s3] sm:$0xf]
        %v749 = vsel %vm317, %v747, 0
        %751 = vmatprep.subr.mxu0 0.0
        %752 = vmatpush1.msra.mxu0 0.0
        %753 = vmatprep.subr.mxu0 0.0
        %754 = vmatpush1.msra.mxu0 0.0
        %755 = vmatprep.subr.mxu0 0.0
        %756 = vmatpush1.msra.mxu0 0.0
        %757 = vmatprep.subr.mxu0 0.0
        %758 = vmatpush1.msra.mxu0 0.0
        %759 = vmatprep.subr.mxu0 0.0
        %760 = vmatpush1.msra.mxu0 0.0
        %761 = vmatprep.subr.mxu0 0.0
        %762 = vmatpush1.msra.mxu0 0.0
        %763 = vmatprep.subr.mxu0 0.0
        %764 = vmatpush1.msra.mxu0 0.0
        %765 = vmatprep.subr.mxu0 0.0
        %766 = vmatpush1.msra.mxu0 0.0
        %767 = vmatprep.subr.mxu0 0.0
        %768 = vmatpush1.msra.mxu0 0.0
        %769 = vmatprep.subr.mxu0 0.0
        %770 = vmatpush1.msra.mxu0 0.0
        %771 = vmatprep.subr.mxu0 0.0
        %772 = vmatpush1.msra.mxu0 0.0
        %773 = vmatprep.subr.mxu0 0.0
        %774 = vmatpush1.msra.mxu0 0.0
        %775 = vmatprep.subr.mxu0 0.0
        %776 = vmatpush1.msra.mxu0 0.0
        %777 = vmatprep.subr.mxu0 0.0
        %778 = vmatpush1.msra.mxu0 0.0
        %779 = vmatprep.subr.mxu0 0.0
        %780 = vmatpush1.msra.mxu0 %v417
        %781 = vmatprep.subr.mxu0 0.0
        %782 = vmatpush1.msra.mxu0 %v411
        %783 = vmatprep.subr.mxu0 0.0
        %784 = vmatpush2.msra.mxu0 0.0
        %785 = vmatprep.subr.mxu0 0.0
        %786 = vmatpush2.msra.mxu0 0.0
        %787 = vmatprep.subr.mxu0 0.0
        %788 = vmatpush2.msra.mxu0 0.0
        %789 = vmatprep.subr.mxu0 0.0
        %790 = vmatpush2.msra.mxu0 0.0
        %791 = vmatprep.subr.mxu0 0.0
        %792 = vmatpush2.msra.mxu0 0.0
        %793 = vmatprep.subr.mxu0 0.0
        %794 = vmatpush2.msra.mxu0 0.0
        %795 = vmatprep.subr.mxu0 0.0
        %796 = vmatpush2.msra.mxu0 0.0
        %797 = vmatprep.subr.mxu0 0.0
        %798 = vmatpush2.msra.mxu0 0.0
        %799 = vmatprep.subr.mxu0 0.0
        %800 = vmatpush2.msra.mxu0 0.0
        %801 = vmatprep.subr.mxu0 0.0
        %802 = vmatpush2.msra.mxu0 0.0
        %803 = vmatprep.subr.mxu0 0.0
        %804 = vmatpush2.msra.mxu0 0.0
        %805 = vmatprep.subr.mxu0 0.0
        %806 = vmatpush2.msra.mxu0 0.0
        %807 = vmatprep.subr.mxu0 0.0
        %808 = vmatpush2.msra.mxu0 0.0
        %809 = vmatprep.subr.mxu0 0.0
        %810 = vmatpush2.msra.mxu0 0.0
        %811 = vmatprep.subr.mxu0 0.0
        %812 = vmatpush2.msra.mxu0 0.0
        %813 = vmatprep.subr.mxu0 0.0
        %814 = vmatpush2.msra.mxu0 0.0
        %815 = vmatprep.mubr.f32.mxu0 0.0
        %816 = vmatmul.mubr.f32.gmra.mxu0 %v749
        %v817 = vpop.f32.mrf.mxu0
        %v818 = vadd.f32 0.0, %v817
        %v819 = vpop.f32.mrf.mxu0
        %820 = vdwg.mxu0
        %vm821 = vcmask 27648
        %822 = vst.msk [vmem:[%s301] sm:$0xf] %vm821, %v818
        %823 = vmatprep.subr.mxu0 0.0
        %824 = vmatpush1.msra.mxu0 0.0
        %825 = vmatprep.subr.mxu0 0.0
        %826 = vmatpush1.msra.mxu0 0.0
        %827 = vmatprep.subr.mxu0 0.0
        %828 = vmatpush1.msra.mxu0 0.0
        %829 = vmatprep.subr.mxu0 0.0
        %830 = vmatpush1.msra.mxu0 0.0
        %831 = vmatprep.subr.mxu0 0.0
        %832 = vmatpush1.msra.mxu0 0.0
        %833 = vmatprep.subr.mxu0 0.0
        %834 = vmatpush1.msra.mxu0 0.0
        %835 = vmatprep.subr.mxu0 0.0
        %836 = vmatpush1.msra.mxu0 0.0
        %837 = vmatprep.subr.mxu0 0.0
        %838 = vmatpush1.msra.mxu0 0.0
        %839 = vmatprep.subr.mxu0 0.0
        %840 = vmatpush1.msra.mxu0 0.0
        %841 = vmatprep.subr.mxu0 0.0
        %842 = vmatpush1.msra.mxu0 0.0
        %843 = vmatprep.subr.mxu0 0.0
        %844 = vmatpush1.msra.mxu0 0.0
        %845 = vmatprep.subr.mxu0 0.0
        %846 = vmatpush1.msra.mxu0 0.0
        %847 = vmatprep.subr.mxu0 0.0
        %848 = vmatpush1.msra.mxu0 0.0
        %849 = vmatprep.subr.mxu0 0.0
        %850 = vmatpush1.msra.mxu0 0.0
        %851 = vmatprep.subr.mxu0 0.0
        %852 = vmatpush1.msra.mxu0 %v429
        %853 = vmatprep.subr.mxu0 0.0
        %854 = vmatpush1.msra.mxu0 %v423
        %855 = vmatprep.subr.mxu0 0.0
        %856 = vmatpush2.msra.mxu0 0.0
        %857 = vmatprep.subr.mxu0 0.0
        %858 = vmatpush2.msra.mxu0 0.0
        %859 = vmatprep.subr.mxu0 0.0
        %860 = vmatpush2.msra.mxu0 0.0
        %861 = vmatprep.subr.mxu0 0.0
        %862 = vmatpush2.msra.mxu0 0.0
        %863 = vmatprep.subr.mxu0 0.0
        %864 = vmatpush2.msra.mxu0 0.0
        %865 = vmatprep.subr.mxu0 0.0
        %866 = vmatpush2.msra.mxu0 0.0
        %867 = vmatprep.subr.mxu0 0.0
        %868 = vmatpush2.msra.mxu0 0.0
        %869 = vmatprep.subr.mxu0 0.0
        %870 = vmatpush2.msra.mxu0 0.0
        %871 = vmatprep.subr.mxu0 0.0
        %872 = vmatpush2.msra.mxu0 0.0
        %873 = vmatprep.subr.mxu0 0.0
        %874 = vmatpush2.msra.mxu0 0.0
        %875 = vmatprep.subr.mxu0 0.0
        %876 = vmatpush2.msra.mxu0 0.0
        %877 = vmatprep.subr.mxu0 0.0
        %878 = vmatpush2.msra.mxu0 0.0
        %879 = vmatprep.subr.mxu0 0.0
        %880 = vmatpush2.msra.mxu0 0.0
        %881 = vmatprep.subr.mxu0 0.0
        %882 = vmatpush2.msra.mxu0 0.0
        %883 = vmatprep.subr.mxu0 0.0
        %884 = vmatpush2.msra.mxu0 0.0
        %885 = vmatprep.subr.mxu0 0.0
        %886 = vmatpush2.msra.mxu0 0.0
        %887 = vmatprep.mubr.f32.mxu0 0.0
        %888 = vmatmul.mubr.f32.gmra.mxu0 %v749
        %v889 = vpop.f32.mrf.mxu0
        %v890 = vadd.f32 0.0, %v889
        %v891 = vpop.f32.mrf.mxu0
        %892 = vdwg.mxu0
        %s893 = scalar_lea.vmem %s301, 4 [#allocation9]
        %894 = vst.msk [vmem:[%s893] sm:$0xf] %vm821, %v890
        %895 = vmatprep.subr.mxu0 0.0
        %896 = vmatpush1.msra.mxu0 0.0
        %897 = vmatprep.subr.mxu0 0.0
        %898 = vmatpush1.msra.mxu0 0.0
        %899 = vmatprep.subr.mxu0 0.0
        %900 = vmatpush1.msra.mxu0 0.0
        %901 = vmatprep.subr.mxu0 0.0
        %902 = vmatpush1.msra.mxu0 0.0
        %903 = vmatprep.subr.mxu0 0.0
        %904 = vmatpush1.msra.mxu0 0.0
        %905 = vmatprep.subr.mxu0 0.0
        %906 = vmatpush1.msra.mxu0 0.0
        %907 = vmatprep.subr.mxu0 0.0
        %908 = vmatpush1.msra.mxu0 0.0
        %909 = vmatprep.subr.mxu0 0.0
        %910 = vmatpush1.msra.mxu0 0.0
        %911 = vmatprep.subr.mxu0 0.0
        %912 = vmatpush1.msra.mxu0 0.0
        %913 = vmatprep.subr.mxu0 0.0
        %914 = vmatpush1.msra.mxu0 0.0
        %915 = vmatprep.subr.mxu0 0.0
        %916 = vmatpush1.msra.mxu0 0.0
        %917 = vmatprep.subr.mxu0 0.0
        %918 = vmatpush1.msra.mxu0 0.0
        %919 = vmatprep.subr.mxu0 0.0
        %920 = vmatpush1.msra.mxu0 0.0
        %921 = vmatprep.subr.mxu0 0.0
        %922 = vmatpush1.msra.mxu0 0.0
        %923 = vmatprep.subr.mxu0 0.0
        %924 = vmatpush1.msra.mxu0 %v441
        %925 = vmatprep.subr.mxu0 0.0
        %926 = vmatpush1.msra.mxu0 %v435
        %927 = vmatprep.subr.mxu0 0.0
        %928 = vmatpush2.msra.mxu0 0.0
        %929 = vmatprep.subr.mxu0 0.0
        %930 = vmatpush2.msra.mxu0 0.0
        %931 = vmatprep.subr.mxu0 0.0
        %932 = vmatpush2.msra.mxu0 0.0
        %933 = vmatprep.subr.mxu0 0.0
        %934 = vmatpush2.msra.mxu0 0.0
        %935 = vmatprep.subr.mxu0 0.0
        %936 = vmatpush2.msra.mxu0 0.0
        %937 = vmatprep.subr.mxu0 0.0
        %938 = vmatpush2.msra.mxu0 0.0
        %939 = vmatprep.subr.mxu0 0.0
        %940 = vmatpush2.msra.mxu0 0.0
        %941 = vmatprep.subr.mxu0 0.0
        %942 = vmatpush2.msra.mxu0 0.0
        %943 = vmatprep.subr.mxu0 0.0
        %944 = vmatpush2.msra.mxu0 0.0
        %945 = vmatprep.subr.mxu0 0.0
        %946 = vmatpush2.msra.mxu0 0.0
        %947 = vmatprep.subr.mxu0 0.0
        %948 = vmatpush2.msra.mxu0 0.0
        %949 = vmatprep.subr.mxu0 0.0
        %950 = vmatpush2.msra.mxu0 0.0
        %951 = vmatprep.subr.mxu0 0.0
        %952 = vmatpush2.msra.mxu0 0.0
        %953 = vmatprep.subr.mxu0 0.0
        %954 = vmatpush2.msra.mxu0 0.0
        %955 = vmatprep.subr.mxu0 0.0
        %956 = vmatpush2.msra.mxu0 0.0
        %957 = vmatprep.subr.mxu0 0.0
        %958 = vmatpush2.msra.mxu0 0.0
        %959 = vmatprep.mubr.f32.mxu0 0.0
        %960 = vmatmul.mubr.f32.gmra.mxu0 %v749
        %v961 = vpop.f32.mrf.mxu0
        %v962 = vadd.f32 0.0, %v961
        %v963 = vpop.f32.mrf.mxu0
        %964 = vdwg.mxu0
        %s965 = scalar_lea.vmem %s301, 8 [#allocation9]
        %966 = vst.msk [vmem:[%s965] sm:$0xf] %vm821, %v962
        %967 = vmatprep.subr.mxu0 0.0
        %968 = vmatpush1.msra.mxu0 0.0
        %969 = vmatprep.subr.mxu0 0.0
        %970 = vmatpush1.msra.mxu0 0.0
        %971 = vmatprep.subr.mxu0 0.0
        %972 = vmatpush1.msra.mxu0 0.0
        %973 = vmatprep.subr.mxu0 0.0
        %974 = vmatpush1.msra.mxu0 0.0
        %975 = vmatprep.subr.mxu0 0.0
        %976 = vmatpush1.msra.mxu0 0.0
        %977 = vmatprep.subr.mxu0 0.0
        %978 = vmatpush1.msra.mxu0 0.0
        %979 = vmatprep.subr.mxu0 0.0
        %980 = vmatpush1.msra.mxu0 0.0
        %981 = vmatprep.subr.mxu0 0.0
        %982 = vmatpush1.msra.mxu0 0.0
        %983 = vmatprep.subr.mxu0 0.0
        %984 = vmatpush1.msra.mxu0 0.0
        %985 = vmatprep.subr.mxu0 0.0
        %986 = vmatpush1.msra.mxu0 0.0
        %987 = vmatprep.subr.mxu0 0.0
        %988 = vmatpush1.msra.mxu0 0.0
        %989 = vmatprep.subr.mxu0 0.0
        %990 = vmatpush1.msra.mxu0 0.0
        %991 = vmatprep.subr.mxu0 0.0
        %992 = vmatpush1.msra.mxu0 0.0
        %993 = vmatprep.subr.mxu0 0.0
        %994 = vmatpush1.msra.mxu0 0.0
        %995 = vmatprep.subr.mxu0 0.0
        %996 = vmatpush1.msra.mxu0 %v453
        %997 = vmatprep.subr.mxu0 0.0
        %998 = vmatpush1.msra.mxu0 %v447
        %999 = vmatprep.subr.mxu0 0.0
        %1000 = vmatpush2.msra.mxu0 0.0
        %1001 = vmatprep.subr.mxu0 0.0
        %1002 = vmatpush2.msra.mxu0 0.0
        %1003 = vmatprep.subr.mxu0 0.0
        %1004 = vmatpush2.msra.mxu0 0.0
        %1005 = vmatprep.subr.mxu0 0.0
        %1006 = vmatpush2.msra.mxu0 0.0
        %1007 = vmatprep.subr.mxu0 0.0
        %1008 = vmatpush2.msra.mxu0 0.0
        %1009 = vmatprep.subr.mxu0 0.0
        %1010 = vmatpush2.msra.mxu0 0.0
        %1011 = vmatprep.subr.mxu0 0.0
        %1012 = vmatpush2.msra.mxu0 0.0
        %1013 = vmatprep.subr.mxu0 0.0
        %1014 = vmatpush2.msra.mxu0 0.0
        %1015 = vmatprep.subr.mxu0 0.0
        %1016 = vmatpush2.msra.mxu0 0.0
        %1017 = vmatprep.subr.mxu0 0.0
        %1018 = vmatpush2.msra.mxu0 0.0
        %1019 = vmatprep.subr.mxu0 0.0
        %1020 = vmatpush2.msra.mxu0 0.0
        %1021 = vmatprep.subr.mxu0 0.0
        %1022 = vmatpush2.msra.mxu0 0.0
        %1023 = vmatprep.subr.mxu0 0.0
        %1024 = vmatpush2.msra.mxu0 0.0
        %1025 = vmatprep.subr.mxu0 0.0
        %1026 = vmatpush2.msra.mxu0 0.0
        %1027 = vmatprep.subr.mxu0 0.0
        %1028 = vmatpush2.msra.mxu0 0.0
        %1029 = vmatprep.subr.mxu0 0.0
        %1030 = vmatpush2.msra.mxu0 0.0
        %1031 = vmatprep.mubr.f32.mxu0 0.0
        %1032 = vmatmul.mubr.f32.gmra.mxu0 %v749
        %v1033 = vpop.f32.mrf.mxu0
        %v1034 = vadd.f32 0.0, %v1033
        %v1035 = vpop.f32.mrf.mxu0
        %1036 = vdwg.mxu0
        %s1037 = scalar_lea.vmem %s301, 12 [#allocation9]
        %1038 = vst.msk [vmem:[%s1037] sm:$0xf] %vm821, %v1034
        %s1039 = sand.u32 %s140, 1
        %s1040 = scalar_lea.sflag [#allocation4], %s1039
        %s1041 = sand.u32 %s140, 1
        %s1042 = smul.addr %s1041, 32
        %s1043 = scalar_lea.vmem [#allocation8], %s1042
        %s1044 = sand.u32 %s168, 1
        %s1045 = scalar_lea.sflag [#allocation10], %s1044
        %s1046 = sand.u32 %s168, 1
        %s1047 = smul.addr %s1046, 16
        %s1048 = scalar_lea.vmem [#allocation9], %s1047
        // Predicated region
        $region49: #{tpu_custom_call.1} parent=35 // pred_check
          %p1049 = pneg %p150
        $region50: #{tpu_custom_call.1} parent=35 // pred_check_branch
          %1051 = sbr.rel (%p1049) target = $region52
        $region51: #{tpu_custom_call.1} parent=35 // pred_region
          %s1052 = smul.u32 4, %s32
          %s1054 = ssub.s32 512, 512
          %1055 = vsyncadd %s1040, %s1054
          %s1056 = smul.addr %s31, 4
          %s1057 = sadd.s32 %s1052, %s1056
          %s1058 = smul.addr %s1057, 128
          %s1059 = scalar_lea.hbm %s4, %s1058
          %s1060 = sshll.u32 %s1043, 4
          %s1061 = int_to_ptr.vmem [resolvable:$true] %s1060
          %1066 = dma.vmem_to_hbm [thread:$0]  %s1061, 512, %s1059, %s1040, 128, 128, 8
        $region52: #{tpu_custom_call.1} parent=35 // pred_fallthru
          _
        // Predicated region
        $region53: #{tpu_custom_call.1} parent=35 // pred_check
          %p1067 = pneg %p178
        $region54: #{tpu_custom_call.1} parent=35 // pred_check_branch
          %1069 = sbr.rel (%p1067) target = $region56
        $region55: #{tpu_custom_call.1} parent=35 // pred_region
          %s1070 = smul.u32 4, %s32
          %s1072 = ssub.s32 256, 256
          %1073 = vsyncadd %s1045, %s1072
          %s1074 = smul.addr %s31, 4
          %s1075 = sadd.s32 %s1070, %s1074
          %s1076 = smul.addr %s1075, 64
          %s1077 = scalar_lea.hbm %s5, %s1076
          %s1078 = sshll.u32 %s1048, 4
          %s1079 = int_to_ptr.vmem [resolvable:$true] %s1078
          %1084 = dma.vmem_to_hbm [thread:$0]  %s1079, 256, %s1077, %s1045, 64, 64, 4
        $region56: #{tpu_custom_call.1} parent=35 // pred_fallthru
          _
      $region36: #{tpu_custom_call.1} parent=5 // pred_fallthru
        _
      %p1085 = scmp.le.s32.totalorder 2, %s22
      // Predicated region
      $region57: #{tpu_custom_call.1} parent=5 // pred_check
        %p1086 = pneg %p1085
      $region58: #{tpu_custom_call.1} parent=5 // pred_check_branch
        %1088 = sbr.rel (%p1086) target = $region60
      $region59: #{tpu_custom_call.1} parent=5 // pred_region
        %s1089 = ssub.s32 %s22, 2
        // Predicated region
        $region61: #{tpu_custom_call.1} parent=59 // pred_check
          %p1090 = pneg %p156
        $region62: #{tpu_custom_call.1} parent=59 // pred_check_branch
          %1092 = sbr.rel (%p1090) target = $region64
        $region63: #{tpu_custom_call.1} parent=59 // pred_region
          %s1093 = sand.u32 %s141, 1
          %s1094 = scalar_lea.sflag [#allocation4], %s1093
          %s1095 = sand.u32 %s141, 1
          %s1096 = smul.addr %s1095, 32
          %s1097 = scalar_lea.vmem [#allocation8], %s1096
          %1098 = dma.done %s1094, 512
        $region64: #{tpu_custom_call.1} parent=59 // pred_fallthru
          _
        // Predicated region
        $region65: #{tpu_custom_call.1} parent=59 // pred_check
          %p1099 = pneg %p184
        $region66: #{tpu_custom_call.1} parent=59 // pred_check_branch
          %1101 = sbr.rel (%p1099) target = $region68
        $region67: #{tpu_custom_call.1} parent=59 // pred_region
          %s1102 = sand.u32 %s169, 1
          %s1103 = scalar_lea.sflag [#allocation10], %s1102
          %s1104 = sand.u32 %s169, 1
          %s1105 = smul.addr %s1104, 16
          %s1106 = scalar_lea.vmem [#allocation9], %s1105
          %1107 = dma.done %s1103, 256
        $region68: #{tpu_custom_call.1} parent=59 // pred_fallthru
          _
      $region60: #{tpu_custom_call.1} parent=5 // pred_fallthru
        _
    $region6: #{tpu_custom_call.1} parent=1 // loop_footer
      %s26 = sadd.s32 1, %s22
    $region7: #{tpu_custom_call.1} parent=1 // loop_footer_branch
      %21 = sbr.rel target = $region3
    $region8: #{tpu_custom_call.1} parent=1 // loop_exit
      _
    %1108 = vsyncpa [#allocation3], 1
    %s1109 = scalar_lea.sflag [#allocation3], 1
    %1110 = vsyncpa %s1109, 1
    %1111 = vsyncpa [#allocation6], 1
    %1112 = vsyncpa [#allocation4], 1
    %s1113 = scalar_lea.sflag [#allocation4], 1
    %1114 = vsyncpa %s1113, 1
    %1115 = vsyncpa [#allocation10], 1
    %s1116 = scalar_lea.sflag [#allocation10], 1
    %1117 = vsyncpa %s1116, 1

</llo_original>
